<compile_context>
chip_gen: v5e
topology: v5e:2x2
jax: 0.10.0
libtpu: 0.0.40
codegen_flags: <defaults>
</compile_context>

<pallas_src>
import jax
import jax.numpy as jnp
from jax import lax
from jax.experimental import pallas as pl
from jax.experimental.pallas import tpu as pltpu


def _round_up(a, m):
    return ((a + m - 1) // m) * m


# ----------------------------- kernels ------------------------------------ #

def _linreg_single_block_kernel(x_ref, w_ref, b_ref, o_ref):
    # x:[B,IN]  w:[OUT,IN]  b:[1,OUT] -> o:[B,OUT]; contract IN (dim 1 of both),
    # so the [OUT, IN] weight feeds the MXU with no transpose.
    acc = lax.dot_general(
        x_ref[...], w_ref[...],
        dimension_numbers=(((1,), (1,)), ((), ())),
        preferred_element_type=jnp.float32,
    )
    o_ref[...] = (acc + b_ref[...].astype(jnp.float32)).astype(o_ref.dtype)


def _linreg_tiled_f32out_kernel(x_ref, w_ref, b_ref, o_ref):
    # x:[tm,tk]  w:[tk,tn] (weight.T tile)  b:[1,tn]  o:[tm,tn] f32, resident
    # across the K grid axis -> accumulate directly into o_ref (no scratch).
    k = pl.program_id(2)

    @pl.when(k == 0)
    def _():
        # Fold the bias into the init instead of a separate epilogue add.
        o_ref[...] = jnp.broadcast_to(b_ref[...].astype(o_ref.dtype), o_ref.shape)

    o_ref[...] += jnp.dot(x_ref[...], w_ref[...],
                          preferred_element_type=jnp.float32)


def _linreg_tiled_scratch_kernel(x_ref, w_ref, b_ref, o_ref, acc_ref):
    # Non-f32 output: keep an f32 VMEM accumulator; bias + cast in the epilogue.
    k = pl.program_id(2)

    @pl.when(k == 0)
    def _():
        acc_ref[...] = jnp.zeros_like(acc_ref)

    acc_ref[...] += jnp.dot(x_ref[...], w_ref[...],
                            preferred_element_type=jnp.float32)

    @pl.when(k == pl.num_programs(2) - 1)
    def _():
        o_ref[...] = (acc_ref[...] + b_ref[...].astype(jnp.float32)
                      ).astype(o_ref.dtype)


# ----------------------------- wrapper ------------------------------------ #

def linreg(x, weight, bias, *, compute_dtype=None, single_block=None):
    B, IN = x.shape
    OUT, IN_w = weight.shape
    assert IN_w == IN
    out_dtype = x.dtype

    # ---- tiny-shape fast path: one block, no padding, no grid --------------
    if single_block is None:
        single_block = (B * IN + OUT * IN + B * OUT) <= (1 << 20) and B <= 1024
    if single_block:
        b2 = bias.reshape(1, OUT)
        return pl.pallas_call(
            _linreg_single_block_kernel,
            out_shape=jax.ShapeDtypeStruct((B, OUT), out_dtype),
            in_specs=[
                pl.BlockSpec((B, IN), lambda: (0, 0)),
                pl.BlockSpec((OUT, IN), lambda: (0, 0)),
                pl.BlockSpec((1, OUT), lambda: (0, 0)),
            ],
            out_specs=pl.BlockSpec((B, OUT), lambda: (0, 0)),
        )(x, weight, b2)

    # ---- tiled path ---------------------------------------------------------
    cdt = jnp.dtype(compute_dtype) if compute_dtype is not None else jnp.dtype(x.dtype)
    align_m = 8 if cdt.itemsize >= 4 else 16  # bf16 sublane packing needs 16

    # Tile selection: big lane-dense tiles (see perf notes above).
    Bp0 = _round_up(B, align_m)
    if Bp0 <= 512:
        tm, Bp = Bp0, Bp0                   # full B in one M block
    else:
        tm = 256
        Bp = _round_up(B, tm)
    OUTp = _round_up(OUT, 128)
    tn = next(c for c in (512, 256, 128) if OUTp % c == 0)
    INp = _round_up(IN, 256)
    tk = next(c for c in (1024, 512, 256) if INp % c == 0)

    # Pad x (per-call; x changes every call so this is unavoidable).
    if (Bp, INp) != (B, IN):
        x_p = jnp.zeros((Bp, INp), x.dtype).at[:B, :IN].set(x)
    else:
        x_p = x
    # Transpose weight to [IN, OUT] and pad in a single fused XLA copy so the
    # kernel contracts ((1,),(0,)) -- the transpose-free MXU layout everywhere.
    # In production, hoist this (and the bias pad) to parameter-init time.
    wT = weight.T
    if (INp, OUTp) != (IN, OUT):
        w_p = jnp.zeros((INp, OUTp), weight.dtype).at[:IN, :OUT].set(wT)
    else:
        w_p = wT
    if OUTp != OUT:
        b_p = jnp.zeros((1, OUTp), bias.dtype).at[0, :OUT].set(bias)
    else:
        b_p = bias.reshape(1, OUT)

    if compute_dtype is not None:
        x_p = x_p.astype(compute_dtype)
        w_p = w_p.astype(compute_dtype)

    grid = (Bp // tm, OUTp // tn, INp // tk)
    grid_m, grid_n, _ = grid

    f32_out = out_dtype == jnp.float32
    kernel = _linreg_tiled_f32out_kernel if f32_out else _linreg_tiled_scratch_kernel
    scratch = [] if f32_out else [pltpu.VMEM((tm, tn), jnp.float32)]

    xi = jnp.dtype(x_p.dtype).itemsize
    wi = jnp.dtype(w_p.dtype).itemsize
    bi = jnp.dtype(b_p.dtype).itemsize
    oi = jnp.dtype(out_dtype).itemsize

    # Double-buffered VMEM footprint of one grid step (+ scratch).
    vmem_bytes = 2 * (tm * tk * xi + tk * tn * wi + tn * bi + tm * tn * oi)
    if not f32_out:
        vmem_bytes += tm * tn * 4
    compiler_kwargs = dict(dimension_semantics=("parallel", "parallel", "arbitrary"))
    if vmem_bytes > (12 << 20):
        # Lift the scoped default but stay well inside v7x's 64 MiB per TC.
        compiler_kwargs["vmem_limit_bytes"] = min(vmem_bytes + (8 << 20), 56 << 20)

    # bytes_accessed includes reuse: x re-streamed per N tile, w per M tile.
    cost = pl.CostEstimate(
        flops=2 * Bp * INp * OUTp,
        transcendentals=0,
        bytes_accessed=(Bp * INp * xi * grid_n
                        + INp * OUTp * wi * grid_m
                        + OUTp * bi * grid_m
                        + Bp * OUTp * oi),
    )

    out_p = pl.pallas_call(
        kernel,
        out_shape=jax.ShapeDtypeStruct((Bp, OUTp), out_dtype),
        grid=grid,
        in_specs=[
            pl.BlockSpec((tm, tk), lambda i, j, k: (i, k)),   # x tile
            pl.BlockSpec((tk, tn), lambda i, j, k: (k, j)),   # weight.T tile
            pl.BlockSpec((1, tn), lambda i, j, k: (0, j)),    # bias tile
        ],
        out_specs=pl.BlockSpec((tm, tn), lambda i, j, k: (i, j)),
        scratch_shapes=scratch,
        compiler_params=pltpu.CompilerParams(**compiler_kwargs),
        cost_estimate=cost,
    )(x_p, w_p, b_p)

    return out_p[:B, :OUT]


# ------------------------------- test -------------------------------------- #

if __name__ == "__main__":
    # Deterministic synthetic parameters and inputs (matches LinReg(32, 16)).
    input_size = 32
    output_size = 16
    batch = 8

    key = jax.random.PRNGKey(0)
    kx, kw, kb = jax.random.split(key, 3)
    x = jax.random.normal(kx, (batch, input_size), dtype=jnp.float32)
    weight = jax.random.normal(kw, (output_size, input_size), dtype=jnp.float32) * 0.1
    bias = jax.random.normal(kb, (output_size,), dtype=jnp.float32) * 0.1

    out = jax.block_until_ready(linreg(x, weight, bias))       # fast path
    ref = x @ weight.T + bias
    assert out.shape == (batch, output_size)
    assert jnp.allclose(out, ref, atol=1e-5, rtol=1e-5)

    # Also exercise the tiled (production-size) path: padding on B, multi-tile
    # N, multi-step K accumulation.
    B2, IN2, OUT2 = 260, 1536, 384
    k2x, k2w, k2b = jax.random.split(jax.random.PRNGKey(1), 3)
    x2 = jax.random.normal(k2x, (B2, IN2), dtype=jnp.float32)
    w2 = jax.random.normal(k2w, (OUT2, IN2), dtype=jnp.float32) * 0.05
    b2 = jax.random.normal(k2b, (OUT2,), dtype=jnp.float32) * 0.05
    out2 = jax.block_until_ready(linreg(x2, w2, b2, single_block=False))
    ref2 = x2 @ w2.T + b2
    assert out2.shape == (B2, OUT2)
    rel_err = jnp.max(jnp.abs(out2 - ref2)) / (jnp.max(jnp.abs(ref2)) + 1e-6)
    assert rel_err < 2e-2, rel_err

    print("KERNEL_OK")
</pallas_src>

<mosaic_0001>
module attributes {stable_mosaic.version = 11 : i64} {
  func.func @_linreg_single_block_kernel(%arg0: memref<8x32xf32, #tpu.memory_space<vmem>>, %arg1: memref<16x32xf32, #tpu.memory_space<vmem>>, %arg2: memref<1x16xf32, #tpu.memory_space<vmem>>, %arg3: memref<8x16xf32, #tpu.memory_space<vmem>>) attributes {dimension_semantics = [], scalar_prefetch = 0 : i64, scratch_operands = 0 : i64, tpu.core_type = #tpu.core_type<tc>} {
    %c0 = arith.constant 0 : index
    %c0_0 = arith.constant 0 : index
    %0 = vector.load %arg0[%c0, %c0_0] : memref<8x32xf32, #tpu.memory_space<vmem>>, vector<8x32xf32>
    %c0_1 = arith.constant 0 : index
    %c0_2 = arith.constant 0 : index
    %1 = vector.load %arg1[%c0_1, %c0_2] : memref<16x32xf32, #tpu.memory_space<vmem>>, vector<16x32xf32>
    %cst = arith.constant dense<0.000000e+00> : vector<8x16xf32>
    %2 = tpu.matmul %0, %1, %cst {dimension_numbers = #tpu.dot_dimension_numbers<[1], [1], [0], [0], [0, 0, 1, 0], [], []>} : vector<8x32xf32>, vector<16x32xf32>, vector<8x16xf32> -> vector<8x16xf32>
    %c0_3 = arith.constant 0 : index
    %c0_4 = arith.constant 0 : index
    %3 = vector.load %arg2[%c0_3, %c0_4] : memref<1x16xf32, #tpu.memory_space<vmem>>, vector<1x16xf32>
    %4 = vector.broadcast %3 : vector<1x16xf32> to vector<8x16xf32>
    %5 = arith.addf %2, %4 : vector<8x16xf32>
    %c0_5 = arith.constant 0 : index
    %c0_6 = arith.constant 0 : index
    %6 = vector.load %arg3[%c0_5, %c0_6] : memref<8x16xf32, #tpu.memory_space<vmem>>, vector<8x16xf32>
    tpu.vector_store %arg3[%c0_5, %c0_6], %5 {strides = array<i32>} : memref<8x16xf32, #tpu.memory_space<vmem>>, vector<8x16xf32>,
    return
  }
}

</mosaic_0001>

<llo_original>
// kernel: tpu_custom_call.1
$region0: #{tpu_custom_call.1}
  #allocation0 [shape = 'u32[]', space=smem, size = 0x4, offset = 0x4, fixed_abs, tag = 'smem constant byte address 0x4 - core index']
  #allocation1 [shape = 'u32[72,128]{1,0:T(1,128)}', space=vmem, size = 0x9000, scoped, tag = 'internal scratch']
  %s0 = inlined_call_operand.hbm [shape: f32[8,32], index: 0, kind: input, shape index: {}]
  %s1 = inlined_call_operand.hbm [shape: f32[16,32], index: 1, kind: input, shape index: {}]
  %s2 = inlined_call_operand.vmem [shape: f32[1,16], index: 2, kind: input, shape index: {}]
  %s3 = inlined_call_operand.hbm [shape: f32[8,16], index: 3, kind: output, shape index: {}]
  %s4 = sld [smem:[#allocation0]]
  $region30: #{tpu_custom_call.1} parent=0
    _
  %s6 = ssub.s32 1, %s4
  %s7 = scalar_select 0, %s6, %s4
  $region1: #{tpu_custom_call.1} parent=0
    #allocation2 [shape = 'u8[4096]{0}', space=vmem, size = 0x1000, scoped, tag = 'input window, operand 0, single buffered']
    #allocation3 [shape = 's32[1]{0}', space=sflag, size = 0x4, scoped, tag = 'scoped memory for tpu_custom_call.1']
    #allocation4 [shape = 's32[1]{0}', space=sflag, size = 0x4, scoped, tag = 'scoped memory for tpu_custom_call.1']
    #allocation5 [shape = 'u8[8192]{0}', space=vmem, size = 0x2000, scoped, tag = 'input window, operand 1, single buffered']
    #allocation6 [shape = 's32[1]{0}', space=sflag, size = 0x4, scoped, tag = 'scoped memory for tpu_custom_call.1']
    #allocation7 [shape = 'u8[4096]{0}', space=vmem, size = 0x1000, scoped, tag = 'output window, operand 0, single buffered']
    %8 = vsyncpa [#allocation3], 0
    %9 = vsyncpa [#allocation6], 0
    %10 = vsyncpa [#allocation4], 0
    // Predicated region
    $region2: #{tpu_custom_call.1} parent=1 // pred_check
      _
    $region3: #{tpu_custom_call.1} parent=1 // pred_check_branch
      %12 = sbr.rel (0) target = $region5
    $region4: #{tpu_custom_call.1} parent=1 // pred_region
      %14 = vsyncadd [#allocation3], 0
      %s16 = sshll.u32 %s0, 4
      %s17 = int_to_ptr.hbm [resolvable:$true] %s16
      %s18 = sshll.u32 [#allocation2], 4
      %s19 = int_to_ptr.vmem [resolvable:$true] %s18
      %21 = dma.hbm_to_vmem [thread:$0]  %s17, 128, %s19, [#allocation3]
    $region5: #{tpu_custom_call.1} parent=1 // pred_fallthru
      _
    // Predicated region
    $region6: #{tpu_custom_call.1} parent=1 // pred_check
      _
    $region7: #{tpu_custom_call.1} parent=1 // pred_check_branch
      %23 = sbr.rel (0) target = $region9
    $region8: #{tpu_custom_call.1} parent=1 // pred_region
      %25 = vsyncadd [#allocation6], 0
      %s26 = sshll.u32 %s1, 4
      %s27 = int_to_ptr.hbm [resolvable:$true] %s26
      %s28 = sshll.u32 [#allocation5], 4
      %s29 = int_to_ptr.vmem [resolvable:$true] %s28
      %34 = dma.hbm_to_vmem [thread:$0]  %s27, 256, %s29, [#allocation6], 128, 128, 8
    $region9: #{tpu_custom_call.1} parent=1 // pred_fallthru
      _
    // Predicated region
    $region10: #{tpu_custom_call.1} parent=1 // pred_check
      _
    $region11: #{tpu_custom_call.1} parent=1 // pred_check_branch
      %36 = sbr.rel (0) target = $region13
    $region12: #{tpu_custom_call.1} parent=1 // pred_region
      _
    $region13: #{tpu_custom_call.1} parent=1 // pred_fallthru
      _
    // Predicated region
    $region14: #{tpu_custom_call.1} parent=1 // pred_check
      _
    $region15: #{tpu_custom_call.1} parent=1 // pred_check_branch
      %38 = sbr.rel (0) target = $region17
    $region16: #{tpu_custom_call.1} parent=1 // pred_region
      %40 = dma.done [#allocation3], 128
    $region17: #{tpu_custom_call.1} parent=1 // pred_fallthru
      _
    // Predicated region
    $region18: #{tpu_custom_call.1} parent=1 // pred_check
      _
    $region19: #{tpu_custom_call.1} parent=1 // pred_check_branch
      %42 = sbr.rel (0) target = $region21
    $region20: #{tpu_custom_call.1} parent=1 // pred_region
      %44 = dma.done [#allocation6], 256
    $region21: #{tpu_custom_call.1} parent=1 // pred_fallthru
      _
    %v45 = vld [vmem:[#allocation2] sm:$0xff]
    %v46 = vld [vmem:[#allocation5] sm:$0xff]
    %v47 = vld [vmem:[#allocation5 + $0x8] sm:$0xff]
    %v48 = vld [vmem:[%s2] sm:$0x1]
    %v50 = vperm.slane %v48, 0
    %vm52 = vcmask 261120
    %v54 = vsel %vm52, %v45, 0
    %v57 = vsel %vm52, %v46, 0
    %v60 = vsel %vm52, %v47, 0
    %62 = vmatpush.xpose.msra.mxu0 0.0
    %63 = vmatpush.xpose.msra.mxu0 0.0
    %64 = vmatpush.xpose.msra.mxu0 0.0
    %65 = vmatpush.xpose.msra.mxu0 0.0
    %66 = vmatpush.xpose.msra.mxu0 0.0
    %67 = vmatpush.xpose.msra.mxu0 0.0
    %68 = vmatpush.xpose.msra.mxu0 0.0
    %69 = vmatpush.xpose.msra.mxu0 0.0
    %70 = vmatpush.xpose.msra.mxu0 0.0
    %71 = vmatpush.xpose.msra.mxu0 0.0
    %72 = vmatpush.xpose.msra.mxu0 0.0
    %73 = vmatpush.xpose.msra.mxu0 0.0
    %74 = vmatpush.xpose.msra.mxu0 0.0
    %75 = vmatpush.xpose.msra.mxu0 0.0
    %76 = vmatpush.xpose.msra.mxu0 %v60
    %77 = vmatpush.xpose.msra.mxu0 %v57
    %78 = vmatmul.f32.gmra.mxu0 %v54
    %v79 = vpop.f32.mrf.mxu0
    %v80 = vadd.f32 %v50, %v79
    %81 = vdwg.mxu0
    %vm82 = vcmask 130048
    %83 = vst.msk [vmem:[#allocation7] sm:$0xff] %vm82, %v80
    // Predicated region
    $region22: #{tpu_custom_call.1} parent=1 // pred_check
      _
    $region23: #{tpu_custom_call.1} parent=1 // pred_check_branch
      %85 = sbr.rel (0) target = $region25
    $region24: #{tpu_custom_call.1} parent=1 // pred_region
      %87 = vsyncadd [#allocation4], 0
      %s89 = sshll.u32 [#allocation7], 4
      %s90 = int_to_ptr.vmem [resolvable:$true] %s89
      %s91 = sshll.u32 %s3, 4
      %s92 = int_to_ptr.hbm [resolvable:$true] %s91
      %94 = dma.vmem_to_hbm [thread:$0]  %s90, 128, %s92, [#allocation4]
    $region25: #{tpu_custom_call.1} parent=1 // pred_fallthru
      _
    // Predicated region
    $region26: #{tpu_custom_call.1} parent=1 // pred_check
      _
    $region27: #{tpu_custom_call.1} parent=1 // pred_check_branch
      %96 = sbr.rel (0) target = $region29
    $region28: #{tpu_custom_call.1} parent=1 // pred_region
      %98 = dma.done [#allocation4], 128
    $region29: #{tpu_custom_call.1} parent=1 // pred_fallthru
      _
    %99 = vsyncpa [#allocation3], 1
    %100 = vsyncpa [#allocation6], 1
    %101 = vsyncpa [#allocation4], 1

</llo_original>
